<compile_context>
chip_gen: v7x
topology: tpu7x:2x2x1
jax: 0.10.0
libtpu: 0.0.40
codegen_flags: <defaults>
</compile_context>

<pallas_src>
import jax
import jax.numpy as jnp
from jax import lax
from jax.experimental import pallas as pl
from jax.experimental.pallas import tpu as pltpu


def lrn_kernel(band_ref, x_ref, o_ref):
    x = x_ref[0]                                   # (C, T) tile
    xf = x.astype(jnp.float32)
    xs = (xf * xf).astype(jnp.bfloat16)

    # sumsq[c, t] = sum_{|j-c|<=2, 0<=j<C} x[j, t]^2  -- banded 0/1 matmul on the MXU.
    sumsq = jnp.dot(band_ref[...], xs, preferred_element_type=jnp.float32)

    base = 2.0 + 0.0001 * sumsq
    # base ** -0.75 == rsqrt(base ** 1.5); base >= 2 so domain-safe. EUP-only.
    inv = lax.rsqrt(base * jnp.sqrt(base))
    o_ref[0] = (xf * inv).astype(o_ref.dtype)


def _vmem_caps():
    """Return (scoped vmem_limit_bytes, tile-sizing budget), generation aware."""
    try:
        cap = pltpu.get_tpu_info().vmem_capacity_bytes
    except Exception:
        cap = 64 * 1024 * 1024                     # conservative (v7x-sized) fallback
    limit = min(cap * 3 // 4, 96 * 1024 * 1024)    # ~48 MiB on v7x, 96 MiB on v5e/v6e
    return limit, limit // 2


def _pick_spatial_tile(hw, n_batch, c, itemsize, budget):
    """Lane tile: lane-dense, tail-free when possible, VMEM-budgeted, >=4 grid blocks."""
    # Per-lane VMEM bytes: double-buffered in+out blocks + ~4 f32 (C, T) temporaries.
    per_lane = c * (4 * itemsize + 4 * 4)
    t_budget = max(128, budget // per_lane)
    if hw <= t_budget:
        t = hw                                     # full-extent block: legal, no tail
    else:
        t_budget = max(128, (t_budget // 128) * 128)
        best_tailfree = None
        best_fat_tail = None
        for cand in range(t_budget, 127, -128):    # lane-dense candidates only
            rem = hw % cand
            if rem == 0:
                best_tailfree = cand
                break
            if best_fat_tail is None and rem >= 512:
                best_fat_tail = cand
        t = best_tailfree or best_fat_tail or t_budget

    # v7x has 2 TensorCores sharing the "parallel" grid axes: aim for >= 4 blocks,
    # but only split when it keeps lane-dense, tail-free blocks.
    def n_blocks(tt):
        return n_batch * ((hw + tt - 1) // tt)

    while n_blocks(t) < 4:
        half = (t // 2 // 128) * 128
        if half < 128 or hw % half != 0:
            break
        t = half
    return t


def lrn_pallas(x):
    N, C, H, W = x.shape
    HW = H * W
    vmem_limit, budget = _vmem_caps()
    T = _pick_spatial_tile(HW, N, C, x.dtype.itemsize, budget)
    x2 = x.reshape(N, C, HW)                       # lane-dense layout: last dim = H*W

    # 5-tap cross-channel band: band[i, j] = 1 iff |i - j| <= 2 (exact in bf16).
    ci = lax.broadcasted_iota(jnp.int32, (C, C), 0)
    cj = lax.broadcasted_iota(jnp.int32, (C, C), 1)
    band = (jnp.abs(ci - cj) <= 2).astype(jnp.bfloat16)

    out2 = pl.pallas_call(
        lrn_kernel,
        out_shape=jax.ShapeDtypeStruct((N, C, HW), x.dtype),
        grid_spec=pltpu.PrefetchScalarGridSpec(
            num_scalar_prefetch=0,
            grid=(N, pl.cdiv(HW, T)),
            in_specs=[
                # DMA'd once, stays VMEM-resident (constant block index).
                pl.BlockSpec((C, C), lambda n, t: (0, 0)),
                pl.BlockSpec((1, C, T), lambda n, t: (n, 0, t)),
            ],
            out_specs=pl.BlockSpec((1, C, T), lambda n, t: (n, 0, t)),
        ),
        compiler_params=pltpu.CompilerParams(
            dimension_semantics=("parallel", "parallel"),
            vmem_limit_bytes=vmem_limit,
        ),
    )(band, x2)
    return out2.reshape(N, C, H, W)


def lrn_ref(x):
    # Pure-JAX mirror of the PyTorch forward (k=2.0, alpha=1e-4*sum, beta=0.75).
    N, C, H, W = x.shape
    x_sq = x * x
    padded = jnp.pad(x_sq, ((0, 0), (2, 2), (0, 0), (0, 0)))
    sumsq = sum(padded[:, s:s + C] for s in range(5))
    return x / (2.0 + 0.0001 * sumsq) ** 0.75


if __name__ == "__main__":
    key = jax.random.PRNGKey(0)
    x = jax.random.normal(key, (2, 4, 16, 16), dtype=jnp.float32)

    out = lrn_pallas(x)
    jax.block_until_ready(out)

    ref = lrn_ref(x)
    assert out.shape == x.shape and out.dtype == x.dtype
    max_err = float(jnp.max(jnp.abs(out - ref)))
    assert jnp.allclose(out, ref, atol=1e-5, rtol=1e-5), max_err

    print("KERNEL_OK")
</pallas_src>

<mosaic_0001>
module attributes {stable_mosaic.version = 11 : i64} {
  func.func @lrn_kernel(%arg0: i32, %arg1: i32, %arg2: memref<4x4xbf16, #tpu.memory_space<vmem>>, %arg3: memref<1x4x128xf32, #tpu.memory_space<vmem>>, %arg4: memref<1x4x128xf32, #tpu.memory_space<vmem>>) attributes {dimension_semantics = [#tpu.dimension_semantics<parallel>, #tpu.dimension_semantics<parallel>], iteration_bounds = array<i64: 2, 2>, scalar_prefetch = 0 : i64, scratch_operands = 0 : i64, tpu.core_type = #tpu.core_type<tc>, window_params = [{pipeline_mode = #tpu.pipeline_mode<synchronous>, transform_indices = @transform_0, window_bounds = array<i64: 4, 4>}, {transform_indices = @transform_1, window_bounds = array<i64: 1, 4, 128>}, {transform_indices = @transform_2, window_bounds = array<i64: 1, 4, 128>}]} {
    %c0 = arith.constant 0 : index
    %c0_0 = arith.constant 0 : index
    %c0_1 = arith.constant 0 : index
    %0 = vector.load %arg3[%c0, %c0_0, %c0_1] : memref<1x4x128xf32, #tpu.memory_space<vmem>>, vector<1x4x128xf32>
    %1 = vector.shape_cast %0 : vector<1x4x128xf32> to vector<4x128xf32>
    %2 = arith.mulf %1, %1 : vector<4x128xf32>
    %3 = arith.truncf %2 : vector<4x128xf32> to vector<4x128xbf16>
    %c0_2 = arith.constant 0 : index
    %c0_3 = arith.constant 0 : index
    %4 = vector.load %arg2[%c0_2, %c0_3] : memref<4x4xbf16, #tpu.memory_space<vmem>>, vector<4x4xbf16>
    %cst = arith.constant dense<0.000000e+00> : vector<4x128xf32>
    %5 = tpu.matmul %4, %3, %cst {dimension_numbers = #tpu.dot_dimension_numbers<[1], [0], [0], [1], [0, 0, 1, 1], [], []>} : vector<4x4xbf16>, vector<4x128xbf16>, vector<4x128xf32> -> vector<4x128xf32>
    %cst_4 = arith.constant 9.99999974E-5 : f32
    %6 = vector.broadcast %cst_4 : f32 to vector<4x128xf32>
    %7 = arith.mulf %6, %5 : vector<4x128xf32>
    %cst_5 = arith.constant 2.000000e+00 : f32
    %8 = vector.broadcast %cst_5 : f32 to vector<4x128xf32>
    %9 = arith.addf %8, %7 : vector<4x128xf32>
    %10 = math.sqrt %9 : vector<4x128xf32>
    %11 = arith.mulf %9, %10 : vector<4x128xf32>
    %12 = math.rsqrt %11 : vector<4x128xf32>
    %13 = arith.mulf %1, %12 : vector<4x128xf32>
    %c0_6 = arith.constant 0 : index
    %c0_7 = arith.constant 0 : index
    %c0_8 = arith.constant 0 : index
    %14 = vector.load %arg4[%c0_6, %c0_7, %c0_8] : memref<1x4x128xf32, #tpu.memory_space<vmem>>, vector<1x4x128xf32>
    %15 = vector.shape_cast %14 : vector<1x4x128xf32> to vector<4x128xf32>
    %16 = vector.shape_cast %13 : vector<4x128xf32> to vector<1x4x128xf32>
    tpu.vector_store %arg4[%c0_6, %c0_7, %c0_8], %16 {strides = array<i32>} : memref<1x4x128xf32, #tpu.memory_space<vmem>>, vector<1x4x128xf32>,
    return
  }
  func.func @transform_0(%arg0: i32, %arg1: i32) -> (i32, i32) {
    %c0_i32 = arith.constant 0 : i32
    %c0_i32_0 = arith.constant 0 : i32
    %c0_i32_1 = arith.constant 0 : i32
    return %c0_i32, %c0_i32_0 : i32, i32
  }
  func.func @transform_1(%arg0: i32, %arg1: i32) -> (i32, i32, i32) {
    %c0_i32 = arith.constant 0 : i32
    %c0_i32_0 = arith.constant 0 : i32
    return %arg0, %c0_i32, %arg1 : i32, i32, i32
  }
  func.func @transform_2(%arg0: i32, %arg1: i32) -> (i32, i32, i32) {
    %c0_i32 = arith.constant 0 : i32
    %c0_i32_0 = arith.constant 0 : i32
    return %arg0, %c0_i32, %arg1 : i32, i32, i32
  }
}

</mosaic_0001>

<llo_original>
// kernel: tpu_custom_call.1
$region0: #{tpu_custom_call.1}
  #allocation0 [shape = 'u32[]', space=smem, size = 0x4, offset = 0x4, fixed_abs, tag = 'smem constant byte address 0x4 - core index']
  #allocation1 [shape = 'u32[144,128]{1,0:T(1,128)}', space=vmem, size = 0x12000, scoped, tag = 'internal scratch']
  %s0 = inlined_call_operand.hbm [shape: bf16[4,4], index: 0, kind: input, shape index: {}]
  %s1 = inlined_call_operand.hbm [shape: f32[2,4,256], index: 1, kind: input, shape index: {}]
  %s2 = inlined_call_operand.hbm [shape: f32[2,4,256], index: 2, kind: output, shape index: {}]
  %s3 = sld [smem:[#allocation0]]
  $region49: #{tpu_custom_call.1} parent=0
    _
  %s5 = ssub.s32 1, %s3
  %s6 = scalar_select 0, %s5, %s3
  $region1: #{tpu_custom_call.1} parent=0
    #allocation2 [shape = 'u8[1024]{0}', space=vmem, size = 0x400, scoped, tag = 'input window, operand 0, single buffered']
    #allocation3 [shape = 's32[2]{0}', space=sflag, size = 0x8, scoped, tag = 'scoped memory for tpu_custom_call.1']
    #allocation4 [shape = 's32[2]{0}', space=sflag, size = 0x8, scoped, tag = 'scoped memory for tpu_custom_call.1']
    #allocation5 [shape = 'u8[4096]{0}', space=vmem, size = 0x1000, scoped, tag = 'input window, operand 1']
    #allocation6 [shape = 's32[2]{0}', space=sflag, size = 0x8, scoped, tag = 'scoped memory for tpu_custom_call.1']
    #allocation7 [shape = 'u8[4096]{0}', space=vmem, size = 0x1000, scoped, tag = 'output window, operand 0']
    %7 = vsyncpa [#allocation3], 0
    %8 = vsyncpa [#allocation6], 0
    %s9 = scalar_lea.sflag [#allocation6], 1
    %10 = vsyncpa %s9, 0
    %11 = vsyncpa [#allocation4], 0
    %s12 = scalar_lea.sflag [#allocation4], 1
    %13 = vsyncpa %s12, 0
    loop: start=0, step=1, limit=6
    $region2: #{tpu_custom_call.1} parent=1 // loop_pre_header
      _
    $region3: #{tpu_custom_call.1} parent=1 // loop_header
      %s15 = sphi 0, %s19
      %p16 = scmp.ge.s32.totalorder %s15, 6
      %s22 = sphi 0, %s34
      %s23 = sphi 0, %s30
      %s24 = sphi 0, %s22
      %s25 = sphi 0, %s23
      %s26 = sphi 0, %s24
      %s27 = sphi 0, %s25
      %s35 = sphi 0, %s35
      %s37 = sphi 0, %s35
      %s38 = sphi 0, %s37
      %s52 = sphi 0, %s38
      %s60 = sphi 0, %s62
      %s63 = sphi 0, %s60
      %s64 = sphi 0, %s63
      %s80 = sphi 0, %s64
      %s88 = sphi 0, %s90
      %s91 = sphi 0, %s88
      %s92 = sphi 0, %s91
      %s108 = sphi 0, %s92
    $region4: #{tpu_custom_call.1} parent=1 // loop_header_branch
      %18 = sbr.rel (%p16) target = $region8
    $region5: #{tpu_custom_call.1} parent=1 // loop_body
      %s20 = ssub.s32 %s15, 1
      %s21 = ssub.s32 %s15, 2
      %s28 = sadd.s32 1, %s23
      %p29 = scmp.ge.s32.totalorder %s28, 2
      %s30 = scalar_select %p29, 0, %s28
      %s31 = sadd.s32 1, %s22
      %s32 = scalar_select %p29, %s31, %s22
      %p33 = scmp.ge.s32.totalorder %s32, 2
      %s34 = scalar_select %p33, 0, %s32
      %s36 = sadd.s32 %s35, 1
      %p39 = scmp.eq.s32.totalorder %s15, 3
      %p40 = scmp.ne.s32.totalorder %s35, %s37
      %p41 = scmp.eq.s32.totalorder %s15, 0
      %p42 = por %p40, %p41
      %p43 = scmp.ne.s32.totalorder %s35, %s37
      %p44 = scmp.eq.s32.totalorder %s20, 3
      %p45 = por %p43, %p44
      %p46 = scmp.ne.s32.totalorder %s37, %s38
      %p47 = scmp.eq.s32.totalorder %s20, 0
      %p48 = por %p46, %p47
      %p49 = scmp.ne.s32.totalorder %s37, %s38
      %p50 = scmp.eq.s32.totalorder %s21, 3
      %p51 = por %p49, %p50
      %p53 = scmp.ne.s32.totalorder %s38, %s52
      %p54 = scmp.eq.s32.totalorder %s21, 0
      %p55 = por %p53, %p54
      %s56 = ssub.s32 %s22, %s34
      %s57 = ssub.s32 %s23, %s30
      %s58 = sor.u32 %s56, %s57
      %p59 = scmp.eq.s32.totalorder %s58, 0
      %s61 = sadd.s32 %s60, 1
      %s62 = scalar_select %p59, %s60, %s61
      %p65 = pneg %p59
      %p66 = scmp.eq.s32.totalorder %s15, 3
      %p67 = por %p65, %p66
      %p68 = scmp.ne.s32.totalorder %s60, %s63
      %p69 = scmp.eq.s32.totalorder %s15, 0
      %p70 = por %p68, %p69
      %p71 = scmp.ne.s32.totalorder %s60, %s63
      %p72 = scmp.eq.s32.totalorder %s20, 3
      %p73 = por %p71, %p72
      %p74 = scmp.ne.s32.totalorder %s63, %s64
      %p75 = scmp.eq.s32.totalorder %s20, 0
      %p76 = por %p74, %p75
      %p77 = scmp.ne.s32.totalorder %s63, %s64
      %p78 = scmp.eq.s32.totalorder %s21, 3
      %p79 = por %p77, %p78
      %p81 = scmp.ne.s32.totalorder %s64, %s80
      %p82 = scmp.eq.s32.totalorder %s21, 0
      %p83 = por %p81, %p82
      %s84 = ssub.s32 %s22, %s34
      %s85 = ssub.s32 %s23, %s30
      %s86 = sor.u32 %s84, %s85
      %p87 = scmp.eq.s32.totalorder %s86, 0
      %s89 = sadd.s32 %s88, 1
      %s90 = scalar_select %p87, %s88, %s89
      %p93 = pneg %p87
      %p94 = scmp.eq.s32.totalorder %s15, 3
      %p95 = por %p93, %p94
      %p96 = scmp.ne.s32.totalorder %s88, %s91
      %p97 = scmp.eq.s32.totalorder %s15, 0
      %p98 = por %p96, %p97
      %p99 = scmp.ne.s32.totalorder %s88, %s91
      %p100 = scmp.eq.s32.totalorder %s20, 3
      %p101 = por %p99, %p100
      %p102 = scmp.ne.s32.totalorder %s91, %s92
      %p103 = scmp.eq.s32.totalorder %s20, 0
      %p104 = por %p102, %p103
      %p105 = scmp.ne.s32.totalorder %s91, %s92
      %p106 = scmp.eq.s32.totalorder %s21, 3
      %p107 = por %p105, %p106
      %p109 = scmp.ne.s32.totalorder %s92, %s108
      %p110 = scmp.eq.s32.totalorder %s21, 0
      %p111 = por %p109, %p110
      %p112 = scmp.le.s32.totalorder 1, %s15
      %p113 = scmp.lt.s32.totalorder %s15, 5
      %p114 = pnand %p112, %p113
      %p115 = pneg %p114
      // Predicated region
      $region9: #{tpu_custom_call.1} parent=5 // pred_check
        _
      $region10: #{tpu_custom_call.1} parent=5 // pred_check_branch
        %117 = sbr.rel (%p114) target = $region12
      $region11: #{tpu_custom_call.1} parent=5 // pred_region
        %s118 = ssub.s32 %s15, 1
        // Predicated region
        $region13: #{tpu_custom_call.1} parent=11 // pred_check
          %p119 = pneg %p48
        $region14: #{tpu_custom_call.1} parent=11 // pred_check_branch
          %121 = sbr.rel (%p119) target = $region16
        $region15: #{tpu_custom_call.1} parent=11 // pred_region
          %s123 = ssub.s32 32, 32
          %124 = vsyncadd [#allocation3], %s123
          %s126 = sshll.u32 [#allocation2], 4
          %s127 = int_to_ptr.vmem [resolvable:$true] %s126
          %129 = dma.hbm_to_vmem [thread:$0]  %s0, 32, %s127, [#allocation3]
        $region16: #{tpu_custom_call.1} parent=11 // pred_fallthru
          _
      $region12: #{tpu_custom_call.1} parent=5 // pred_fallthru
        _
      %p130 = scmp.lt.s32.totalorder %s15, 4
      // Predicated region
      $region17: #{tpu_custom_call.1} parent=5 // pred_check
        %p131 = pneg %p130
      $region18: #{tpu_custom_call.1} parent=5 // pred_check_branch
        %133 = sbr.rel (%p131) target = $region20
      $region19: #{tpu_custom_call.1} parent=5 // pred_region
        // Predicated region
        $region21: #{tpu_custom_call.1} parent=19 // pred_check
          %p134 = pneg %p70
        $region22: #{tpu_custom_call.1} parent=19 // pred_check_branch
          %136 = sbr.rel (%p134) target = $region24
        $region23: #{tpu_custom_call.1} parent=19 // pred_region
          %s137 = sand.u32 %s60, 1
          %s138 = scalar_lea.sflag [#allocation6], %s137
          %s139 = sand.u32 %s60, 1
          %s140 = smul.addr %s139, 4
          %s141 = scalar_lea.vmem [#allocation5], %s140
          %s143 = ssub.s32 64, 64
          %144 = vsyncadd %s138, %s143
          %s145 = smul.addr %s22, 2
          %s146 = sadd.s32 %s23, %s145
          %s147 = smul.addr %s146, 64
          %s148 = scalar_lea.hbm %s1, %s147
          %s150 = sshll.u32 %s141, 4
          %s151 = int_to_ptr.vmem [resolvable:$true] %s150
          %153 = dma.hbm_to_vmem [thread:$0]  %s148, 64, %s151, %s138
        $region24: #{tpu_custom_call.1} parent=19 // pred_fallthru
          _
      $region20: #{tpu_custom_call.1} parent=5 // pred_fallthru
        _
      %p154 = scmp.le.s32.totalorder 1, %s15
      %p155 = scmp.lt.s32.totalorder %s15, 5
      %p156 = pnand %p154, %p155
      %p157 = pneg %p156
      // Predicated region
      $region25: #{tpu_custom_call.1} parent=5 // pred_check
        _
      $region26: #{tpu_custom_call.1} parent=5 // pred_check_branch
        %159 = sbr.rel (%p156) target = $region28
      $region27: #{tpu_custom_call.1} parent=5 // pred_region
        %s160 = ssub.s32 %s15, 1
        // Predicated region
        $region29: #{tpu_custom_call.1} parent=27 // pred_check
          %p161 = pneg %p48
        $region30: #{tpu_custom_call.1} parent=27 // pred_check_branch
          %163 = sbr.rel (%p161) target = $region32
        $region31: #{tpu_custom_call.1} parent=27 // pred_region
          %164 = dma.done [#allocation3], 32
        $region32: #{tpu_custom_call.1} parent=27 // pred_fallthru
          _
        %s165 = sand.u32 %s63, 1
        %s166 = scalar_lea.sflag [#allocation6], %s165
        %s167 = sand.u32 %s63, 1
        %s168 = smul.addr %s167, 4
        %s169 = scalar_lea.vmem [#allocation5], %s168
        // Predicated region
        $region33: #{tpu_custom_call.1} parent=27 // pred_check
          %p170 = pneg %p76
        $region34: #{tpu_custom_call.1} parent=27 // pred_check_branch
          %172 = sbr.rel (%p170) target = $region36
        $region35: #{tpu_custom_call.1} parent=27 // pred_region
          %173 = dma.done %s166, 64
        $region36: #{tpu_custom_call.1} parent=27 // pred_fallthru
          _
        %p174 = pneg %p48
        %p175 = pneg %p45
        %s176 = sand.u32 %s63, 1
        %s177 = scalar_lea.sflag [#allocation6], %s176
        %s178 = sand.u32 %s63, 1
        %s179 = smul.addr %s178, 4
        %s180 = scalar_lea.vmem [#allocation5], %s179
        %p181 = pneg %p76
        %p182 = pneg %p73
        %p183 = pneg %p104
        %p184 = pneg %p101
        %s185 = sand.u32 %s91, 1
        %s186 = scalar_lea.sflag [#allocation4], %s185
        %s187 = sand.u32 %s91, 1
        %s188 = smul.addr %s187, 4
        %s189 = scalar_lea.vmem [#allocation7], %s188
        %v191 = vld [vmem:[%s169] sm:$0xf]
        %v192 = vmul.f32 %v191, %v191
        %v193 = vpack.c.bf16 %v192, %v192
        %v194 = vld [vmem:[#allocation2] sm:$0x3]
        %vm195 = vcmask 31744
        %v197 = vsel %vm195, %v194, 0
        %vm199 = vcmask 1041408
        %v201 = vsel %vm199, %v193, 0
        %203 = vmatprep.subr.bf16.mxu0 0
        %204 = vmatpush1.bf16.msra.mxu0 %v201
        %205 = vmatprep.subr.bf16.mxu0 0
        %206 = vmatpush1.bf16.msra.mxu0 0
        %207 = vmatprep.subr.bf16.mxu0 0
        %208 = vmatpush1.bf16.msra.mxu0 0
        %209 = vmatprep.subr.bf16.mxu0 0
        %210 = vmatpush1.bf16.msra.mxu0 0
        %211 = vmatprep.subr.bf16.mxu0 0
        %212 = vmatpush1.bf16.msra.mxu0 0
        %213 = vmatprep.subr.bf16.mxu0 0
        %214 = vmatpush1.bf16.msra.mxu0 0
        %215 = vmatprep.subr.bf16.mxu0 0
        %216 = vmatpush1.bf16.msra.mxu0 0
        %217 = vmatprep.subr.bf16.mxu0 0
        %218 = vmatpush1.bf16.msra.mxu0 0
        %219 = vmatprep.subr.bf16.mxu0 0
        %220 = vmatpush1.bf16.msra.mxu0 0
        %221 = vmatprep.subr.bf16.mxu0 0
        %222 = vmatpush1.bf16.msra.mxu0 0
        %223 = vmatprep.subr.bf16.mxu0 0
        %224 = vmatpush1.bf16.msra.mxu0 0
        %225 = vmatprep.subr.bf16.mxu0 0
        %226 = vmatpush1.bf16.msra.mxu0 0
        %227 = vmatprep.subr.bf16.mxu0 0
        %228 = vmatpush1.bf16.msra.mxu0 0
        %229 = vmatprep.subr.bf16.mxu0 0
        %230 = vmatpush1.bf16.msra.mxu0 0
        %231 = vmatprep.subr.bf16.mxu0 0
        %232 = vmatpush1.bf16.msra.mxu0 0
        %233 = vmatprep.subr.bf16.mxu0 0
        %234 = vmatpush1.bf16.msra.mxu0 0
        %235 = vmatprep.mubr.bf16.mxu0 0
        %236 = vmatmul.mubr.bf16.gmra.mrb[0].mxu0 %v197
        %v237 = vpop.f32.mrb[0].mxu0
        %v238 = vadd.f32 0.0, %v237
        %v239 = vpop.f32.mrb[0].mxu0
        %v240 = vpop.f32.mrb[0].mxu0
        %v241 = vpop.f32.mrb[0].mxu0
        %242 = vdwg.mxu0
        %v243 = vmul.f32 %v238, 0.0001
        %v244 = vadd.f32 %v243, 2.0
        %v245 = vrsqrt.pop %v244
        %v246 = vmul.f32 %v244, %v245
        %vm247 = vcmp.eq.f32.partialorder %v244, inf
        %v248 = vsel %vm247, %v244, %v246
        %vm249 = vcmp.eq.f32.partialorder %v244, 0.0
        %v250 = vand.u32 %v244, 2147483648
        %v251 = vsel %vm249, %v250, %v248
        %v252 = vmul.f32 %v244, %v251
        %v253 = vrsqrt.pop %v252
        %v254 = vmul.f32 %v191, %v253
        %255 = vst [vmem:[%s189] sm:$0xf] %v254
        %s256 = sand.u32 %s91, 1
        %s257 = scalar_lea.sflag [#allocation4], %s256
        %s258 = sand.u32 %s91, 1
        %s259 = smul.addr %s258, 4
        %s260 = scalar_lea.vmem [#allocation7], %s259
        // Predicated region
        $region37: #{tpu_custom_call.1} parent=27 // pred_check
          %p261 = pneg %p101
        $region38: #{tpu_custom_call.1} parent=27 // pred_check_branch
          %263 = sbr.rel (%p261) target = $region40
        $region39: #{tpu_custom_call.1} parent=27 // pred_region
          %s265 = ssub.s32 64, 64
          %266 = vsyncadd %s257, %s265
          %s267 = smul.addr %s24, 2
          %s268 = sadd.s32 %s25, %s267
          %s269 = smul.addr %s268, 64
          %s270 = scalar_lea.hbm %s2, %s269
          %s272 = sshll.u32 %s260, 4
          %s273 = int_to_ptr.vmem [resolvable:$true] %s272
          %275 = dma.vmem_to_hbm [thread:$0]  %s273, 64, %s270, %s257
        $region40: #{tpu_custom_call.1} parent=27 // pred_fallthru
          _
      $region28: #{tpu_custom_call.1} parent=5 // pred_fallthru
        _
      %p276 = scmp.le.s32.totalorder 2, %s15
      // Predicated region
      $region41: #{tpu_custom_call.1} parent=5 // pred_check
        %p277 = pneg %p276
      $region42: #{tpu_custom_call.1} parent=5 // pred_check_branch
        %279 = sbr.rel (%p277) target = $region44
      $region43: #{tpu_custom_call.1} parent=5 // pred_region
        %s280 = ssub.s32 %s15, 2
        // Predicated region
        $region45: #{tpu_custom_call.1} parent=43 // pred_check
          %p281 = pneg %p107
        $region46: #{tpu_custom_call.1} parent=43 // pred_check_branch
          %283 = sbr.rel (%p281) target = $region48
        $region47: #{tpu_custom_call.1} parent=43 // pred_region
          %s284 = sand.u32 %s92, 1
          %s285 = scalar_lea.sflag [#allocation4], %s284
          %s286 = sand.u32 %s92, 1
          %s287 = smul.addr %s286, 4
          %s288 = scalar_lea.vmem [#allocation7], %s287
          %289 = dma.done %s285, 64
        $region48: #{tpu_custom_call.1} parent=43 // pred_fallthru
          _
      $region44: #{tpu_custom_call.1} parent=5 // pred_fallthru
        _
    $region6: #{tpu_custom_call.1} parent=1 // loop_footer
      %s19 = sadd.s32 1, %s15
    $region7: #{tpu_custom_call.1} parent=1 // loop_footer_branch
      %14 = sbr.rel target = $region3
    $region8: #{tpu_custom_call.1} parent=1 // loop_exit
      _
    %290 = vsyncpa [#allocation3], 1
    %s291 = scalar_lea.sflag [#allocation3], 1
    %292 = vsyncpa %s291, 1
    %293 = vsyncpa [#allocation6], 1
    %s294 = scalar_lea.sflag [#allocation6], 1
    %295 = vsyncpa %s294, 1
    %296 = vsyncpa [#allocation4], 1
    %s297 = scalar_lea.sflag [#allocation4], 1
    %298 = vsyncpa %s297, 1

</llo_original>
